<compile_context>
chip_gen: v5e
topology: v5e:2x2
jax: 0.10.0
libtpu: 0.0.40
codegen_flags: <defaults>
</compile_context>

<pallas_src>
import functools

import jax
import jax.numpy as jnp
from jax import lax
from jax.experimental import pallas as pl
from jax.experimental.pallas import tpu as pltpu


def _fused_rnn_kernel(x_ref, root_ref, wih_t_ref, whh_t_ref, b_ref,
                      wfc_h_ref, wfc_root_ref, bfc_ref, o_ref,
                      xw_scr, h_all_scr, *, seq_len, batch):
    """Whole forward in one grid step: projection -> recurrence -> fused fc."""
    # ---- Phase 1: hoisted input projection (one MXU matmul, no seq dependence).
    #   xw[t*B + b, :] = x[t, b, :] @ W_ih^T + (b_ih + b_hh)
    xw_scr[...] = (
        jnp.dot(x_ref[...], wih_t_ref[...], preferred_element_type=jnp.float32)
        + b_ref[...]
    )

    # ---- Phase 2: sequential recurrence, fully unrolled in-kernel.
    # Only one matmul + tanh per step on the serial critical path.  Row offsets
    # are static and batch is padded to a multiple of 8 sublanes -> aligned.
    hidden = whh_t_ref.shape[0]
    h = jnp.zeros((batch, hidden), jnp.float32)
    for t in range(seq_len):
        rows = pl.ds(t * batch, batch)
        h = jnp.tanh(
            xw_scr[rows, :]
            + jnp.dot(h, whh_t_ref[...], preferred_element_type=jnp.float32)
        )
        h_all_scr[rows, :] = h

    # ---- Phase 3: hoisted fc epilogue.  fc(cat(h, is_root)) without the concat:
    #   h @ W_fc[:, :H]^T  +  is_root * W_fc[:, H]^T  +  b_fc
    # Output last dim is padded to 128 lanes -> lane-dense (unmasked) stores.
    o_ref[...] = (
        jnp.dot(h_all_scr[...], wfc_h_ref[...], preferred_element_type=jnp.float32)
        + root_ref[...] * wfc_root_ref[...]
        + bfc_ref[...]
    ).astype(o_ref.dtype)


def simple_rnn_forward(x, is_root, params):
    """x: (S, B, I), is_root: (S, B) -> (S, B, C), matching SimpleRNN.forward."""
    S, B, I = x.shape
    H = params["w_hh"].shape[0]
    C = params["w_fc"].shape[0]

    B_pad = ((B + 7) // 8) * 8         # sublane multiple -> aligned row blocks
    C_pad = ((C + 127) // 128) * 128   # lane multiple    -> lane-dense output

    f32 = jnp.float32
    # --- Parameter prep (plain JAX glue, done once). --------------------------
    wih_t = params["w_ih"].astype(f32).T                       # (I, H)
    whh_t = params["w_hh"].astype(f32).T                       # (H, H)
    b_rnn = (params["b_ih"] + params["b_hh"]).astype(f32).reshape(1, H)
    wfc_h = jnp.zeros((H, C_pad), f32).at[:, :C].set(params["w_fc"][:, :H].astype(f32).T)
    wfc_root = jnp.zeros((1, C_pad), f32).at[0, :C].set(params["w_fc"][:, H].astype(f32))
    b_fc = jnp.zeros((1, C_pad), f32).at[0, :C].set(params["b_fc"].astype(f32))
    # Note: for large H on v6e/v7x, cast wih_t/whh_t/wfc_h (and x) to bf16 here
    # (MXU operands) while keeping f32 accumulation + f32 tanh/bias (VPU/EUP).

    # --- Pad batch to a sublane multiple and flatten (seq, batch) -> rows. -----
    x_p = jnp.zeros((S, B_pad, I), f32).at[:, :B, :].set(x.astype(f32))
    r_p = jnp.zeros((S, B_pad, 1), f32).at[:, :B, 0].set(is_root.astype(f32))
    x2d = x_p.reshape(S * B_pad, I)
    r2d = r_p.reshape(S * B_pad, 1)

    kernel = functools.partial(_fused_rnn_kernel, seq_len=S, batch=B_pad)
    full = lambda shape: pl.BlockSpec(shape, lambda i: (0,) * len(shape))

    out2d = pl.pallas_call(
        kernel,
        out_shape=jax.ShapeDtypeStruct((S * B_pad, C_pad), f32),
        grid_spec=pltpu.PrefetchScalarGridSpec(
            num_scalar_prefetch=0,
            grid=(1,),                      # single grid step; loop runs in-kernel
            in_specs=[
                full((S * B_pad, I)),       # x, flattened (seq*batch, input)
                full((S * B_pad, 1)),       # is_root, flattened
                full((I, H)),               # W_ih^T
                full((H, H)),               # W_hh^T
                full((1, H)),               # b_ih + b_hh
                full((H, C_pad)),           # W_fc[:, :H]^T (lane-padded)
                full((1, C_pad)),           # W_fc[:, H]    (lane-padded)
                full((1, C_pad)),           # b_fc          (lane-padded)
            ],
            out_specs=full((S * B_pad, C_pad)),
            scratch_shapes=[
                pltpu.VMEM((S * B_pad, H), f32),   # xw: projected inputs
                pltpu.VMEM((S * B_pad, H), f32),   # all hidden states
            ],
        ),
        compiler_params=pltpu.CompilerParams(
            # Recurrence is inherently sequential; a batch grid axis (not time)
            # could be marked "parallel" for v7x megacore at larger B.
            dimension_semantics=("arbitrary",),
            vmem_limit_bytes=32 * 1024 * 1024,
        ),
    )(x2d, r2d, wih_t, whh_t, b_rnn, wfc_h, wfc_root, b_fc)

    return out2d.reshape(S, B_pad, C_pad)[:, :B, :C]


def _reference_forward(x, is_root, params):
    """Pure-JAX reference mirroring the PyTorch forward."""
    H = params["w_hh"].shape[0]

    def step(h, inputs):
        x_t, r_t = inputs
        h = jnp.tanh(x_t @ params["w_ih"].T + params["b_ih"]
                     + h @ params["w_hh"].T + params["b_hh"])
        cat = jnp.concatenate([h, r_t[:, None].astype(jnp.float32)], axis=-1)
        y = cat @ params["w_fc"].T + params["b_fc"]
        return h, y

    h0 = jnp.zeros((x.shape[1], H), jnp.float32)
    _, ys = lax.scan(step, h0, (x, is_root))
    return ys


if __name__ == "__main__":
    # Small shapes consistent with the module's forward.
    S, B, I, H, C = 8, 4, 16, 32, 10

    key = jax.random.PRNGKey(0)
    ks = jax.random.split(key, 8)
    bound_rnn = 1.0 / jnp.sqrt(H)
    bound_fc = 1.0 / jnp.sqrt(H + 1)
    params = {
        "w_ih": jax.random.uniform(ks[0], (H, I), jnp.float32, -bound_rnn, bound_rnn),
        "w_hh": jax.random.uniform(ks[1], (H, H), jnp.float32, -bound_rnn, bound_rnn),
        "b_ih": jax.random.uniform(ks[2], (H,), jnp.float32, -bound_rnn, bound_rnn),
        "b_hh": jax.random.uniform(ks[3], (H,), jnp.float32, -bound_rnn, bound_rnn),
        "w_fc": jax.random.uniform(ks[4], (C, H + 1), jnp.float32, -bound_fc, bound_fc),
        "b_fc": jax.random.uniform(ks[5], (C,), jnp.float32, -bound_fc, bound_fc),
    }

    x = jax.random.normal(ks[6], (S, B, I), jnp.float32)
    is_root = (jax.random.uniform(ks[7], (S, B)) > 0.5).astype(jnp.int32)

    out = jax.block_until_ready(simple_rnn_forward(x, is_root, params))
    ref = jax.block_until_ready(_reference_forward(x, is_root, params))

    assert out.shape == (S, B, C)
    assert jnp.allclose(out, ref, atol=1e-4, rtol=1e-4)
    print("KERNEL_OK")
</pallas_src>

<mosaic_0001>
module attributes {stable_mosaic.version = 11 : i64} {
  func.func @_fused_rnn_kernel(%arg0: i32, %arg1: memref<64x16xf32, #tpu.memory_space<vmem>>, %arg2: memref<64x1xf32, #tpu.memory_space<vmem>>, %arg3: memref<16x32xf32, #tpu.memory_space<vmem>>, %arg4: memref<32x32xf32, #tpu.memory_space<vmem>>, %arg5: memref<1x32xf32, #tpu.memory_space<vmem>>, %arg6: memref<32x128xf32, #tpu.memory_space<vmem>>, %arg7: memref<1x128xf32, #tpu.memory_space<vmem>>, %arg8: memref<1x128xf32, #tpu.memory_space<vmem>>, %arg9: memref<64x128xf32, #tpu.memory_space<vmem>>, %arg10: memref<64x32xf32, #tpu.memory_space<vmem>>, %arg11: memref<64x32xf32, #tpu.memory_space<vmem>>) attributes {dimension_semantics = [#tpu.dimension_semantics<arbitrary>], iteration_bounds = array<i64: 1>, scalar_prefetch = 0 : i64, scratch_operands = 2 : i64, tpu.core_type = #tpu.core_type<tc>, window_params = [{pipeline_mode = #tpu.pipeline_mode<synchronous>, transform_indices = @transform_0, window_bounds = array<i64: 64, 16>}, {pipeline_mode = #tpu.pipeline_mode<synchronous>, transform_indices = @transform_1, window_bounds = array<i64: 64, 1>}, {pipeline_mode = #tpu.pipeline_mode<synchronous>, transform_indices = @transform_2, window_bounds = array<i64: 16, 32>}, {pipeline_mode = #tpu.pipeline_mode<synchronous>, transform_indices = @transform_3, window_bounds = array<i64: 32, 32>}, {pipeline_mode = #tpu.pipeline_mode<synchronous>, transform_indices = @transform_4, window_bounds = array<i64: 1, 32>}, {pipeline_mode = #tpu.pipeline_mode<synchronous>, transform_indices = @transform_5, window_bounds = array<i64: 32, 128>}, {pipeline_mode = #tpu.pipeline_mode<synchronous>, transform_indices = @transform_6, window_bounds = array<i64: 1, 128>}, {pipeline_mode = #tpu.pipeline_mode<synchronous>, transform_indices = @transform_7, window_bounds = array<i64: 1, 128>}, {pipeline_mode = #tpu.pipeline_mode<synchronous>, transform_indices = @transform_8, window_bounds = array<i64: 64, 128>}]} {
    %c0 = arith.constant 0 : index
    %c0_0 = arith.constant 0 : index
    %0 = vector.load %arg1[%c0, %c0_0] : memref<64x16xf32, #tpu.memory_space<vmem>>, vector<64x16xf32>
    %c0_1 = arith.constant 0 : index
    %c0_2 = arith.constant 0 : index
    %1 = vector.load %arg3[%c0_1, %c0_2] : memref<16x32xf32, #tpu.memory_space<vmem>>, vector<16x32xf32>
    %cst = arith.constant dense<0.000000e+00> : vector<64x32xf32>
    %2 = tpu.matmul %0, %1, %cst {dimension_numbers = #tpu.dot_dimension_numbers<[1], [0], [0], [1], [0, 0, 1, 1], [], []>} : vector<64x16xf32>, vector<16x32xf32>, vector<64x32xf32> -> vector<64x32xf32>
    %c0_3 = arith.constant 0 : index
    %c0_4 = arith.constant 0 : index
    %3 = vector.load %arg5[%c0_3, %c0_4] : memref<1x32xf32, #tpu.memory_space<vmem>>, vector<1x32xf32>
    %4 = vector.broadcast %3 : vector<1x32xf32> to vector<64x32xf32>
    %5 = arith.addf %2, %4 : vector<64x32xf32>
    %c0_5 = arith.constant 0 : index
    %c0_6 = arith.constant 0 : index
    %6 = vector.load %arg10[%c0_5, %c0_6] : memref<64x32xf32, #tpu.memory_space<vmem>>, vector<64x32xf32>
    tpu.vector_store %arg10[%c0_5, %c0_6], %5 {strides = array<i32>} : memref<64x32xf32, #tpu.memory_space<vmem>>, vector<64x32xf32>,
    %cst_7 = arith.constant 0.000000e+00 : f32
    %7 = vector.broadcast %cst_7 : f32 to vector<8x32xf32>
    %c0_8 = arith.constant 0 : index
    %c0_9 = arith.constant 0 : index
    %8 = vector.load %arg10[%c0_8, %c0_9] : memref<64x32xf32, #tpu.memory_space<vmem>>, vector<8x32xf32>
    %c0_10 = arith.constant 0 : index
    %c0_11 = arith.constant 0 : index
    %9 = vector.load %arg4[%c0_10, %c0_11] : memref<32x32xf32, #tpu.memory_space<vmem>>, vector<32x32xf32>
    %cst_12 = arith.constant dense<0.000000e+00> : vector<8x32xf32>
    %10 = tpu.matmul %7, %9, %cst_12 {dimension_numbers = #tpu.dot_dimension_numbers<[1], [0], [0], [1], [0, 0, 1, 1], [], []>} : vector<8x32xf32>, vector<32x32xf32>, vector<8x32xf32> -> vector<8x32xf32>
    %11 = arith.addf %8, %10 : vector<8x32xf32>
    %12 = math.tanh %11 : vector<8x32xf32>
    %c0_13 = arith.constant 0 : index
    %c0_14 = arith.constant 0 : index
    %13 = vector.load %arg11[%c0_13, %c0_14] : memref<64x32xf32, #tpu.memory_space<vmem>>, vector<8x32xf32>
    tpu.vector_store %arg11[%c0_13, %c0_14], %12 {strides = array<i32>} : memref<64x32xf32, #tpu.memory_space<vmem>>, vector<8x32xf32>,
    %c8 = arith.constant 8 : index
    %c0_15 = arith.constant 0 : index
    %14 = vector.load %arg10[%c8, %c0_15] : memref<64x32xf32, #tpu.memory_space<vmem>>, vector<8x32xf32>
    %c0_16 = arith.constant 0 : index
    %c0_17 = arith.constant 0 : index
    %15 = vector.load %arg4[%c0_16, %c0_17] : memref<32x32xf32, #tpu.memory_space<vmem>>, vector<32x32xf32>
    %cst_18 = arith.constant dense<0.000000e+00> : vector<8x32xf32>
    %16 = tpu.matmul %12, %15, %cst_18 {dimension_numbers = #tpu.dot_dimension_numbers<[1], [0], [0], [1], [0, 0, 1, 1], [], []>} : vector<8x32xf32>, vector<32x32xf32>, vector<8x32xf32> -> vector<8x32xf32>
    %17 = arith.addf %14, %16 : vector<8x32xf32>
    %18 = math.tanh %17 : vector<8x32xf32>
    %c8_19 = arith.constant 8 : index
    %c0_20 = arith.constant 0 : index
    %19 = vector.load %arg11[%c8_19, %c0_20] : memref<64x32xf32, #tpu.memory_space<vmem>>, vector<8x32xf32>
    tpu.vector_store %arg11[%c8_19, %c0_20], %18 {strides = array<i32>} : memref<64x32xf32, #tpu.memory_space<vmem>>, vector<8x32xf32>,
    %c16 = arith.constant 16 : index
    %c0_21 = arith.constant 0 : index
    %20 = vector.load %arg10[%c16, %c0_21] : memref<64x32xf32, #tpu.memory_space<vmem>>, vector<8x32xf32>
    %c0_22 = arith.constant 0 : index
    %c0_23 = arith.constant 0 : index
    %21 = vector.load %arg4[%c0_22, %c0_23] : memref<32x32xf32, #tpu.memory_space<vmem>>, vector<32x32xf32>
    %cst_24 = arith.constant dense<0.000000e+00> : vector<8x32xf32>
    %22 = tpu.matmul %18, %21, %cst_24 {dimension_numbers = #tpu.dot_dimension_numbers<[1], [0], [0], [1], [0, 0, 1, 1], [], []>} : vector<8x32xf32>, vector<32x32xf32>, vector<8x32xf32> -> vector<8x32xf32>
    %23 = arith.addf %20, %22 : vector<8x32xf32>
    %24 = math.tanh %23 : vector<8x32xf32>
    %c16_25 = arith.constant 16 : index
    %c0_26 = arith.constant 0 : index
    %25 = vector.load %arg11[%c16_25, %c0_26] : memref<64x32xf32, #tpu.memory_space<vmem>>, vector<8x32xf32>
    tpu.vector_store %arg11[%c16_25, %c0_26], %24 {strides = array<i32>} : memref<64x32xf32, #tpu.memory_space<vmem>>, vector<8x32xf32>,
    %c24 = arith.constant 24 : index
    %c0_27 = arith.constant 0 : index
    %26 = vector.load %arg10[%c24, %c0_27] : memref<64x32xf32, #tpu.memory_space<vmem>>, vector<8x32xf32>
    %c0_28 = arith.constant 0 : index
    %c0_29 = arith.constant 0 : index
    %27 = vector.load %arg4[%c0_28, %c0_29] : memref<32x32xf32, #tpu.memory_space<vmem>>, vector<32x32xf32>
    %cst_30 = arith.constant dense<0.000000e+00> : vector<8x32xf32>
    %28 = tpu.matmul %24, %27, %cst_30 {dimension_numbers = #tpu.dot_dimension_numbers<[1], [0], [0], [1], [0, 0, 1, 1], [], []>} : vector<8x32xf32>, vector<32x32xf32>, vector<8x32xf32> -> vector<8x32xf32>
    %29 = arith.addf %26, %28 : vector<8x32xf32>
    %30 = math.tanh %29 : vector<8x32xf32>
    %c24_31 = arith.constant 24 : index
    %c0_32 = arith.constant 0 : index
    %31 = vector.load %arg11[%c24_31, %c0_32] : memref<64x32xf32, #tpu.memory_space<vmem>>, vector<8x32xf32>
    tpu.vector_store %arg11[%c24_31, %c0_32], %30 {strides = array<i32>} : memref<64x32xf32, #tpu.memory_space<vmem>>, vector<8x32xf32>,
    %c32 = arith.constant 32 : index
    %c0_33 = arith.constant 0 : index
    %32 = vector.load %arg10[%c32, %c0_33] : memref<64x32xf32, #tpu.memory_space<vmem>>, vector<8x32xf32>
    %c0_34 = arith.constant 0 : index
    %c0_35 = arith.constant 0 : index
    %33 = vector.load %arg4[%c0_34, %c0_35] : memref<32x32xf32, #tpu.memory_space<vmem>>, vector<32x32xf32>
    %cst_36 = arith.constant dense<0.000000e+00> : vector<8x32xf32>
    %34 = tpu.matmul %30, %33, %cst_36 {dimension_numbers = #tpu.dot_dimension_numbers<[1], [0], [0], [1], [0, 0, 1, 1], [], []>} : vector<8x32xf32>, vector<32x32xf32>, vector<8x32xf32> -> vector<8x32xf32>
    %35 = arith.addf %32, %34 : vector<8x32xf32>
    %36 = math.tanh %35 : vector<8x32xf32>
    %c32_37 = arith.constant 32 : index
    %c0_38 = arith.constant 0 : index
    %37 = vector.load %arg11[%c32_37, %c0_38] : memref<64x32xf32, #tpu.memory_space<vmem>>, vector<8x32xf32>
    tpu.vector_store %arg11[%c32_37, %c0_38], %36 {strides = array<i32>} : memref<64x32xf32, #tpu.memory_space<vmem>>, vector<8x32xf32>,
    %c40 = arith.constant 40 : index
    %c0_39 = arith.constant 0 : index
    %38 = vector.load %arg10[%c40, %c0_39] : memref<64x32xf32, #tpu.memory_space<vmem>>, vector<8x32xf32>
    %c0_40 = arith.constant 0 : index
    %c0_41 = arith.constant 0 : index
    %39 = vector.load %arg4[%c0_40, %c0_41] : memref<32x32xf32, #tpu.memory_space<vmem>>, vector<32x32xf32>
    %cst_42 = arith.constant dense<0.000000e+00> : vector<8x32xf32>
    %40 = tpu.matmul %36, %39, %cst_42 {dimension_numbers = #tpu.dot_dimension_numbers<[1], [0], [0], [1], [0, 0, 1, 1], [], []>} : vector<8x32xf32>, vector<32x32xf32>, vector<8x32xf32> -> vector<8x32xf32>
    %41 = arith.addf %38, %40 : vector<8x32xf32>
    %42 = math.tanh %41 : vector<8x32xf32>
    %c40_43 = arith.constant 40 : index
    %c0_44 = arith.constant 0 : index
    %43 = vector.load %arg11[%c40_43, %c0_44] : memref<64x32xf32, #tpu.memory_space<vmem>>, vector<8x32xf32>
    tpu.vector_store %arg11[%c40_43, %c0_44], %42 {strides = array<i32>} : memref<64x32xf32, #tpu.memory_space<vmem>>, vector<8x32xf32>,
    %c48 = arith.constant 48 : index
    %c0_45 = arith.constant 0 : index
    %44 = vector.load %arg10[%c48, %c0_45] : memref<64x32xf32, #tpu.memory_space<vmem>>, vector<8x32xf32>
    %c0_46 = arith.constant 0 : index
    %c0_47 = arith.constant 0 : index
    %45 = vector.load %arg4[%c0_46, %c0_47] : memref<32x32xf32, #tpu.memory_space<vmem>>, vector<32x32xf32>
    %cst_48 = arith.constant dense<0.000000e+00> : vector<8x32xf32>
    %46 = tpu.matmul %42, %45, %cst_48 {dimension_numbers = #tpu.dot_dimension_numbers<[1], [0], [0], [1], [0, 0, 1, 1], [], []>} : vector<8x32xf32>, vector<32x32xf32>, vector<8x32xf32> -> vector<8x32xf32>
    %47 = arith.addf %44, %46 : vector<8x32xf32>
    %48 = math.tanh %47 : vector<8x32xf32>
    %c48_49 = arith.constant 48 : index
    %c0_50 = arith.constant 0 : index
    %49 = vector.load %arg11[%c48_49, %c0_50] : memref<64x32xf32, #tpu.memory_space<vmem>>, vector<8x32xf32>
    tpu.vector_store %arg11[%c48_49, %c0_50], %48 {strides = array<i32>} : memref<64x32xf32, #tpu.memory_space<vmem>>, vector<8x32xf32>,
    %c56 = arith.constant 56 : index
    %c0_51 = arith.constant 0 : index
    %50 = vector.load %arg10[%c56, %c0_51] : memref<64x32xf32, #tpu.memory_space<vmem>>, vector<8x32xf32>
    %c0_52 = arith.constant 0 : index
    %c0_53 = arith.constant 0 : index
    %51 = vector.load %arg4[%c0_52, %c0_53] : memref<32x32xf32, #tpu.memory_space<vmem>>, vector<32x32xf32>
    %cst_54 = arith.constant dense<0.000000e+00> : vector<8x32xf32>
    %52 = tpu.matmul %48, %51, %cst_54 {dimension_numbers = #tpu.dot_dimension_numbers<[1], [0], [0], [1], [0, 0, 1, 1], [], []>} : vector<8x32xf32>, vector<32x32xf32>, vector<8x32xf32> -> vector<8x32xf32>
    %53 = arith.addf %50, %52 : vector<8x32xf32>
    %54 = math.tanh %53 : vector<8x32xf32>
    %c56_55 = arith.constant 56 : index
    %c0_56 = arith.constant 0 : index
    %55 = vector.load %arg11[%c56_55, %c0_56] : memref<64x32xf32, #tpu.memory_space<vmem>>, vector<8x32xf32>
    tpu.vector_store %arg11[%c56_55, %c0_56], %54 {strides = array<i32>} : memref<64x32xf32, #tpu.memory_space<vmem>>, vector<8x32xf32>,
    %c0_57 = arith.constant 0 : index
    %c0_58 = arith.constant 0 : index
    %56 = vector.load %arg11[%c0_57, %c0_58] : memref<64x32xf32, #tpu.memory_space<vmem>>, vector<64x32xf32>
    %c0_59 = arith.constant 0 : index
    %c0_60 = arith.constant 0 : index
    %57 = vector.load %arg6[%c0_59, %c0_60] : memref<32x128xf32, #tpu.memory_space<vmem>>, vector<32x128xf32>
    %cst_61 = arith.constant dense<0.000000e+00> : vector<64x128xf32>
    %58 = tpu.matmul %56, %57, %cst_61 {dimension_numbers = #tpu.dot_dimension_numbers<[1], [0], [0], [1], [0, 0, 1, 1], [], []>} : vector<64x32xf32>, vector<32x128xf32>, vector<64x128xf32> -> vector<64x128xf32>
    %c0_62 = arith.constant 0 : index
    %c0_63 = arith.constant 0 : index
    %59 = vector.load %arg2[%c0_62, %c0_63] : memref<64x1xf32, #tpu.memory_space<vmem>>, vector<64x1xf32>
    %c0_64 = arith.constant 0 : index
    %c0_65 = arith.constant 0 : index
    %60 = vector.load %arg7[%c0_64, %c0_65] : memref<1x128xf32, #tpu.memory_space<vmem>>, vector<1x128xf32>
    %61 = vector.broadcast %59 : vector<64x1xf32> to vector<64x128xf32>
    %62 = vector.broadcast %60 : vector<1x128xf32> to vector<64x128xf32>
    %63 = arith.mulf %61, %62 : vector<64x128xf32>
    %64 = arith.addf %58, %63 : vector<64x128xf32>
    %c0_66 = arith.constant 0 : index
    %c0_67 = arith.constant 0 : index
    %65 = vector.load %arg8[%c0_66, %c0_67] : memref<1x128xf32, #tpu.memory_space<vmem>>, vector<1x128xf32>
    %66 = vector.broadcast %65 : vector<1x128xf32> to vector<64x128xf32>
    %67 = arith.addf %64, %66 : vector<64x128xf32>
    %c0_68 = arith.constant 0 : index
    %c0_69 = arith.constant 0 : index
    %68 = vector.load %arg9[%c0_68, %c0_69] : memref<64x128xf32, #tpu.memory_space<vmem>>, vector<64x128xf32>
    tpu.vector_store %arg9[%c0_68, %c0_69], %67 {strides = array<i32>} : memref<64x128xf32, #tpu.memory_space<vmem>>, vector<64x128xf32>,
    return
  }
  func.func @transform_0(%arg0: i32) -> (i32, i32) {
    %c0_i32 = arith.constant 0 : i32
    %c0_i32_0 = arith.constant 0 : i32
    %c0_i32_1 = arith.constant 0 : i32
    return %c0_i32, %c0_i32_0 : i32, i32
  }
  func.func @transform_1(%arg0: i32) -> (i32, i32) {
    %c0_i32 = arith.constant 0 : i32
    %c0_i32_0 = arith.constant 0 : i32
    %c0_i32_1 = arith.constant 0 : i32
    return %c0_i32, %c0_i32_0 : i32, i32
  }
  func.func @transform_2(%arg0: i32) -> (i32, i32) {
    %c0_i32 = arith.constant 0 : i32
    %c0_i32_0 = arith.constant 0 : i32
    %c0_i32_1 = arith.constant 0 : i32
    return %c0_i32, %c0_i32_0 : i32, i32
  }
  func.func @transform_3(%arg0: i32) -> (i32, i32) {
    %c0_i32 = arith.constant 0 : i32
    %c0_i32_0 = arith.constant 0 : i32
    %c0_i32_1 = arith.constant 0 : i32
    return %c0_i32, %c0_i32_0 : i32, i32
  }
  func.func @transform_4(%arg0: i32) -> (i32, i32) {
    %c0_i32 = arith.constant 0 : i32
    %c0_i32_0 = arith.constant 0 : i32
    %c0_i32_1 = arith.constant 0 : i32
    return %c0_i32, %c0_i32_0 : i32, i32
  }
  func.func @transform_5(%arg0: i32) -> (i32, i32) {
    %c0_i32 = arith.constant 0 : i32
    %c0_i32_0 = arith.constant 0 : i32
    %c0_i32_1 = arith.constant 0 : i32
    return %c0_i32, %c0_i32_0 : i32, i32
  }
  func.func @transform_6(%arg0: i32) -> (i32, i32) {
    %c0_i32 = arith.constant 0 : i32
    %c0_i32_0 = arith.constant 0 : i32
    %c0_i32_1 = arith.constant 0 : i32
    return %c0_i32, %c0_i32_0 : i32, i32
  }
  func.func @transform_7(%arg0: i32) -> (i32, i32) {
    %c0_i32 = arith.constant 0 : i32
    %c0_i32_0 = arith.constant 0 : i32
    %c0_i32_1 = arith.constant 0 : i32
    return %c0_i32, %c0_i32_0 : i32, i32
  }
  func.func @transform_8(%arg0: i32) -> (i32, i32) {
    %c0_i32 = arith.constant 0 : i32
    %c0_i32_0 = arith.constant 0 : i32
    %c0_i32_1 = arith.constant 0 : i32
    return %c0_i32, %c0_i32_0 : i32, i32
  }
}

</mosaic_0001>

<llo_original>
// kernel: tpu_custom_call.1
$region0: #{tpu_custom_call.1}
  #allocation0 [shape = 'u32[]', space=smem, size = 0x4, offset = 0x4, fixed_abs, tag = 'smem constant byte address 0x4 - core index']
  #allocation1 [shape = 'u32[72,128]{1,0:T(1,128)}', space=vmem, size = 0x9000, scoped, tag = 'internal scratch']
  #allocation2 [shape = 'f32[64,32]{1,0:T(8,128)}', space=vmem, size = 0x8000, scoped, tag = 'scratch operand']
  #allocation3 [shape = 'f32[64,32]{1,0:T(8,128)}', space=vmem, size = 0x8000, scoped, tag = 'scratch operand']
  %s0 = inlined_call_operand.vmem [shape: f32[64,16], index: 0, kind: input, shape index: {}]
  %s1 = inlined_call_operand.vmem [shape: f32[64,1], index: 1, kind: input, shape index: {}]
  %s2 = inlined_call_operand.vmem [shape: f32[16,32], index: 2, kind: input, shape index: {}]
  %s3 = inlined_call_operand.vmem [shape: f32[32,32], index: 3, kind: input, shape index: {}]
  %s4 = inlined_call_operand.vmem [shape: f32[1,32], index: 4, kind: input, shape index: {}]
  %s5 = inlined_call_operand.vmem [shape: f32[32,128], index: 5, kind: input, shape index: {}]
  %s6 = inlined_call_operand.vmem [shape: f32[1,128], index: 6, kind: input, shape index: {}]
  %s7 = inlined_call_operand.vmem [shape: f32[1,128], index: 7, kind: input, shape index: {}]
  %s8 = inlined_call_operand.hbm [shape: f32[64,128], index: 8, kind: output, shape index: {}]
  %s9 = sld [smem:[#allocation0]]
  $region42: #{tpu_custom_call.1} parent=0
    _
  %s11 = ssub.s32 1, %s9
  %s12 = scalar_select 0, %s11, %s9
  $region1: #{tpu_custom_call.1} parent=0
    #allocation4 [shape = 'u8[32768]{0}', space=vmem, size = 0x8000, scoped, tag = 'output window, operand 0, single buffered']
    #allocation5 [shape = 's32[1]{0}', space=sflag, size = 0x4, scoped, tag = 'scoped memory for tpu_custom_call.1']
    %13 = vsyncpa [#allocation5], 0
    // Predicated region
    $region2: #{tpu_custom_call.1} parent=1 // pred_check
      _
    $region3: #{tpu_custom_call.1} parent=1 // pred_check_branch
      %15 = sbr.rel (0) target = $region5
    $region4: #{tpu_custom_call.1} parent=1 // pred_region
      _
    $region5: #{tpu_custom_call.1} parent=1 // pred_fallthru
      _
    // Predicated region
    $region6: #{tpu_custom_call.1} parent=1 // pred_check
      _
    $region7: #{tpu_custom_call.1} parent=1 // pred_check_branch
      %17 = sbr.rel (0) target = $region9
    $region8: #{tpu_custom_call.1} parent=1 // pred_region
      _
    $region9: #{tpu_custom_call.1} parent=1 // pred_fallthru
      _
    // Predicated region
    $region10: #{tpu_custom_call.1} parent=1 // pred_check
      _
    $region11: #{tpu_custom_call.1} parent=1 // pred_check_branch
      %19 = sbr.rel (0) target = $region13
    $region12: #{tpu_custom_call.1} parent=1 // pred_region
      _
    $region13: #{tpu_custom_call.1} parent=1 // pred_fallthru
      _
    // Predicated region
    $region14: #{tpu_custom_call.1} parent=1 // pred_check
      _
    $region15: #{tpu_custom_call.1} parent=1 // pred_check_branch
      %21 = sbr.rel (0) target = $region17
    $region16: #{tpu_custom_call.1} parent=1 // pred_region
      _
    $region17: #{tpu_custom_call.1} parent=1 // pred_fallthru
      _
    // Predicated region
    $region18: #{tpu_custom_call.1} parent=1 // pred_check
      _
    $region19: #{tpu_custom_call.1} parent=1 // pred_check_branch
      %23 = sbr.rel (0) target = $region21
    $region20: #{tpu_custom_call.1} parent=1 // pred_region
      _
    $region21: #{tpu_custom_call.1} parent=1 // pred_fallthru
      _
    // Predicated region
    $region22: #{tpu_custom_call.1} parent=1 // pred_check
      _
    $region23: #{tpu_custom_call.1} parent=1 // pred_check_branch
      %25 = sbr.rel (0) target = $region25
    $region24: #{tpu_custom_call.1} parent=1 // pred_region
      _
    $region25: #{tpu_custom_call.1} parent=1 // pred_fallthru
      _
    // Predicated region
    $region26: #{tpu_custom_call.1} parent=1 // pred_check
      _
    $region27: #{tpu_custom_call.1} parent=1 // pred_check_branch
      %27 = sbr.rel (0) target = $region29
    $region28: #{tpu_custom_call.1} parent=1 // pred_region
      _
    $region29: #{tpu_custom_call.1} parent=1 // pred_fallthru
      _
    // Predicated region
    $region30: #{tpu_custom_call.1} parent=1 // pred_check
      _
    $region31: #{tpu_custom_call.1} parent=1 // pred_check_branch
      %29 = sbr.rel (0) target = $region33
    $region32: #{tpu_custom_call.1} parent=1 // pred_region
      _
    $region33: #{tpu_custom_call.1} parent=1 // pred_fallthru
      _
    %v30 = vld [vmem:[%s0] sm:$0xff]
    %v31 = vld [vmem:[%s0 + $0x8] sm:$0xff]
    %v32 = vld [vmem:[%s0 + $0x10] sm:$0xff]
    %v33 = vld [vmem:[%s0 + $0x18] sm:$0xff]
    %v34 = vld [vmem:[%s0 + $0x20] sm:$0xff]
    %v35 = vld [vmem:[%s0 + $0x28] sm:$0xff]
    %v36 = vld [vmem:[%s0 + $0x30] sm:$0xff]
    %v37 = vld [vmem:[%s0 + $0x38] sm:$0xff]
    %v38 = vld [vmem:[%s2] sm:$0xff]
    %v39 = vld [vmem:[%s2 + $0x8] sm:$0xff]
    %v40 = vld [vmem:[%s4] sm:$0x1]
    %v42 = vperm.slane %v40, 0
    %vm44 = vcmask 130048
    %v46 = vsel %vm44, %v30, 0
    %v49 = vsel %vm44, %v31, 0
    %v52 = vsel %vm44, %v32, 0
    %v55 = vsel %vm44, %v33, 0
    %v58 = vsel %vm44, %v34, 0
    %v61 = vsel %vm44, %v35, 0
    %v64 = vsel %vm44, %v36, 0
    %v67 = vsel %vm44, %v37, 0
    %69 = vmatpush.msra.mxu0 0.0
    %70 = vmatpush.msra.mxu0 0.0
    %71 = vmatpush.msra.mxu0 0.0
    %72 = vmatpush.msra.mxu0 0.0
    %73 = vmatpush.msra.mxu0 0.0
    %74 = vmatpush.msra.mxu0 0.0
    %75 = vmatpush.msra.mxu0 0.0
    %76 = vmatpush.msra.mxu0 0.0
    %77 = vmatpush.msra.mxu0 0.0
    %78 = vmatpush.msra.mxu0 0.0
    %79 = vmatpush.msra.mxu0 0.0
    %80 = vmatpush.msra.mxu0 0.0
    %81 = vmatpush.msra.mxu0 0.0
    %82 = vmatpush.msra.mxu0 0.0
    %83 = vmatpush.msra.mxu0 %v39
    %84 = vmatpush.msra.mxu0 %v38
    %85 = vmatmul.f32.gmra.mxu0 %v46
    %v86 = vpop.f32.mrf.mxu0
    %v87 = vadd.f32 %v42, %v86
    %88 = vmatmul.f32.gmra.mxu0 %v49
    %v89 = vpop.f32.mrf.mxu0
    %v90 = vadd.f32 %v42, %v89
    %91 = vmatmul.f32.gmra.mxu0 %v52
    %v92 = vpop.f32.mrf.mxu0
    %v93 = vadd.f32 %v42, %v92
    %94 = vmatmul.f32.gmra.mxu0 %v55
    %v95 = vpop.f32.mrf.mxu0
    %v96 = vadd.f32 %v42, %v95
    %97 = vmatmul.f32.gmra.mxu0 %v58
    %v98 = vpop.f32.mrf.mxu0
    %v99 = vadd.f32 %v42, %v98
    %100 = vmatmul.f32.gmra.mxu0 %v61
    %v101 = vpop.f32.mrf.mxu0
    %v102 = vadd.f32 %v42, %v101
    %103 = vmatmul.f32.gmra.mxu0 %v64
    %v104 = vpop.f32.mrf.mxu0
    %v105 = vadd.f32 %v42, %v104
    %106 = vmatmul.f32.gmra.mxu0 %v67
    %v107 = vpop.f32.mrf.mxu0
    %v108 = vadd.f32 %v42, %v107
    %109 = vdwg.mxu0
    %vm110 = vcmask 261120
    %111 = vst.msk [vmem:[#allocation2] sm:$0xff] %vm110, %v87
    %112 = vst.msk [vmem:[#allocation2 + $0x8] sm:$0xff] %vm110, %v90
    %113 = vst.msk [vmem:[#allocation2 + $0x10] sm:$0xff] %vm110, %v93
    %114 = vst.msk [vmem:[#allocation2 + $0x18] sm:$0xff] %vm110, %v96
    %115 = vst.msk [vmem:[#allocation2 + $0x20] sm:$0xff] %vm110, %v99
    %116 = vst.msk [vmem:[#allocation2 + $0x28] sm:$0xff] %vm110, %v102
    %117 = vst.msk [vmem:[#allocation2 + $0x30] sm:$0xff] %vm110, %v105
    %118 = vst.msk [vmem:[#allocation2 + $0x38] sm:$0xff] %vm110, %v108
    %v119 = vld [vmem:[#allocation2] sm:$0xff]
    %v120 = vld [vmem:[%s3] sm:$0xff]
    %v121 = vld [vmem:[%s3 + $0x8] sm:$0xff]
    %v122 = vld [vmem:[%s3 + $0x10] sm:$0xff]
    %v123 = vld [vmem:[%s3 + $0x18] sm:$0xff]
    %v125 = vsel %vm110, 0.0, 0
    %127 = vmatpush.msra.mxu0 0.0
    %128 = vmatpush.msra.mxu0 0.0
    %129 = vmatpush.msra.mxu0 0.0
    %130 = vmatpush.msra.mxu0 0.0
    %131 = vmatpush.msra.mxu0 0.0
    %132 = vmatpush.msra.mxu0 0.0
    %133 = vmatpush.msra.mxu0 0.0
    %134 = vmatpush.msra.mxu0 0.0
    %135 = vmatpush.msra.mxu0 0.0
    %136 = vmatpush.msra.mxu0 0.0
    %137 = vmatpush.msra.mxu0 0.0
    %138 = vmatpush.msra.mxu0 0.0
    %139 = vmatpush.msra.mxu0 %v123
    %140 = vmatpush.msra.mxu0 %v122
    %141 = vmatpush.msra.mxu0 %v121
    %142 = vmatpush.msra.mxu0 %v120
    %143 = vmatmul.f32.gmra.mxu0 %v125
    %v144 = vpop.f32.mrf.mxu0
    %v145 = vadd.f32 0.0, %v144
    %146 = vdwg.mxu0
    %v147 = vadd.f32 %v119, %v145
    %v148 = vtanh.pop %v147
    %149 = vst.msk [vmem:[#allocation3] sm:$0xff] %vm110, %v148
    %v150 = vld [vmem:[#allocation2 + $0x8] sm:$0xff]
    %v151 = vld [vmem:[%s3] sm:$0xff]
    %v152 = vld [vmem:[%s3 + $0x8] sm:$0xff]
    %v153 = vld [vmem:[%s3 + $0x10] sm:$0xff]
    %v154 = vld [vmem:[%s3 + $0x18] sm:$0xff]
    %v156 = vsel %vm110, %v148, 0
    %158 = vmatpush.msra.mxu0 0.0
    %159 = vmatpush.msra.mxu0 0.0
    %160 = vmatpush.msra.mxu0 0.0
    %161 = vmatpush.msra.mxu0 0.0
    %162 = vmatpush.msra.mxu0 0.0
    %163 = vmatpush.msra.mxu0 0.0
    %164 = vmatpush.msra.mxu0 0.0
    %165 = vmatpush.msra.mxu0 0.0
    %166 = vmatpush.msra.mxu0 0.0
    %167 = vmatpush.msra.mxu0 0.0
    %168 = vmatpush.msra.mxu0 0.0
    %169 = vmatpush.msra.mxu0 0.0
    %170 = vmatpush.msra.mxu0 %v154
    %171 = vmatpush.msra.mxu0 %v153
    %172 = vmatpush.msra.mxu0 %v152
    %173 = vmatpush.msra.mxu0 %v151
    %174 = vmatmul.f32.gmra.mxu0 %v156
    %v175 = vpop.f32.mrf.mxu0
    %v176 = vadd.f32 0.0, %v175
    %177 = vdwg.mxu0
    %v178 = vadd.f32 %v150, %v176
    %v179 = vtanh.pop %v178
    %180 = vst.msk [vmem:[#allocation3 + $0x8] sm:$0xff] %vm110, %v179
    %v181 = vld [vmem:[#allocation2 + $0x10] sm:$0xff]
    %v182 = vld [vmem:[%s3] sm:$0xff]
    %v183 = vld [vmem:[%s3 + $0x8] sm:$0xff]
    %v184 = vld [vmem:[%s3 + $0x10] sm:$0xff]
    %v185 = vld [vmem:[%s3 + $0x18] sm:$0xff]
    %v187 = vsel %vm110, %v179, 0
    %189 = vmatpush.msra.mxu0 0.0
    %190 = vmatpush.msra.mxu0 0.0
    %191 = vmatpush.msra.mxu0 0.0
    %192 = vmatpush.msra.mxu0 0.0
    %193 = vmatpush.msra.mxu0 0.0
    %194 = vmatpush.msra.mxu0 0.0
    %195 = vmatpush.msra.mxu0 0.0
    %196 = vmatpush.msra.mxu0 0.0
    %197 = vmatpush.msra.mxu0 0.0
    %198 = vmatpush.msra.mxu0 0.0
    %199 = vmatpush.msra.mxu0 0.0
    %200 = vmatpush.msra.mxu0 0.0
    %201 = vmatpush.msra.mxu0 %v185
    %202 = vmatpush.msra.mxu0 %v184
    %203 = vmatpush.msra.mxu0 %v183
    %204 = vmatpush.msra.mxu0 %v182
    %205 = vmatmul.f32.gmra.mxu0 %v187
    %v206 = vpop.f32.mrf.mxu0
    %v207 = vadd.f32 0.0, %v206
    %208 = vdwg.mxu0
    %v209 = vadd.f32 %v181, %v207
    %v210 = vtanh.pop %v209
    %211 = vst.msk [vmem:[#allocation3 + $0x10] sm:$0xff] %vm110, %v210
    %v212 = vld [vmem:[#allocation2 + $0x18] sm:$0xff]
    %v213 = vld [vmem:[%s3] sm:$0xff]
    %v214 = vld [vmem:[%s3 + $0x8] sm:$0xff]
    %v215 = vld [vmem:[%s3 + $0x10] sm:$0xff]
    %v216 = vld [vmem:[%s3 + $0x18] sm:$0xff]
    %v218 = vsel %vm110, %v210, 0
    %220 = vmatpush.msra.mxu0 0.0
    %221 = vmatpush.msra.mxu0 0.0
    %222 = vmatpush.msra.mxu0 0.0
    %223 = vmatpush.msra.mxu0 0.0
    %224 = vmatpush.msra.mxu0 0.0
    %225 = vmatpush.msra.mxu0 0.0
    %226 = vmatpush.msra.mxu0 0.0
    %227 = vmatpush.msra.mxu0 0.0
    %228 = vmatpush.msra.mxu0 0.0
    %229 = vmatpush.msra.mxu0 0.0
    %230 = vmatpush.msra.mxu0 0.0
    %231 = vmatpush.msra.mxu0 0.0
    %232 = vmatpush.msra.mxu0 %v216
    %233 = vmatpush.msra.mxu0 %v215
    %234 = vmatpush.msra.mxu0 %v214
    %235 = vmatpush.msra.mxu0 %v213
    %236 = vmatmul.f32.gmra.mxu0 %v218
    %v237 = vpop.f32.mrf.mxu0
    %v238 = vadd.f32 0.0, %v237
    %239 = vdwg.mxu0
    %v240 = vadd.f32 %v212, %v238
    %v241 = vtanh.pop %v240
    %242 = vst.msk [vmem:[#allocation3 + $0x18] sm:$0xff] %vm110, %v241
    %v243 = vld [vmem:[#allocation2 + $0x20] sm:$0xff]
    %v244 = vld [vmem:[%s3] sm:$0xff]
    %v245 = vld [vmem:[%s3 + $0x8] sm:$0xff]
    %v246 = vld [vmem:[%s3 + $0x10] sm:$0xff]
    %v247 = vld [vmem:[%s3 + $0x18] sm:$0xff]
    %v249 = vsel %vm110, %v241, 0
    %251 = vmatpush.msra.mxu0 0.0
    %252 = vmatpush.msra.mxu0 0.0
    %253 = vmatpush.msra.mxu0 0.0
    %254 = vmatpush.msra.mxu0 0.0
    %255 = vmatpush.msra.mxu0 0.0
    %256 = vmatpush.msra.mxu0 0.0
    %257 = vmatpush.msra.mxu0 0.0
    %258 = vmatpush.msra.mxu0 0.0
    %259 = vmatpush.msra.mxu0 0.0
    %260 = vmatpush.msra.mxu0 0.0
    %261 = vmatpush.msra.mxu0 0.0
    %262 = vmatpush.msra.mxu0 0.0
    %263 = vmatpush.msra.mxu0 %v247
    %264 = vmatpush.msra.mxu0 %v246
    %265 = vmatpush.msra.mxu0 %v245
    %266 = vmatpush.msra.mxu0 %v244
    %267 = vmatmul.f32.gmra.mxu0 %v249
    %v268 = vpop.f32.mrf.mxu0
    %v269 = vadd.f32 0.0, %v268
    %270 = vdwg.mxu0
    %v271 = vadd.f32 %v243, %v269
    %v272 = vtanh.pop %v271
    %273 = vst.msk [vmem:[#allocation3 + $0x20] sm:$0xff] %vm110, %v272
    %v274 = vld [vmem:[#allocation2 + $0x28] sm:$0xff]
    %v275 = vld [vmem:[%s3] sm:$0xff]
    %v276 = vld [vmem:[%s3 + $0x8] sm:$0xff]
    %v277 = vld [vmem:[%s3 + $0x10] sm:$0xff]
    %v278 = vld [vmem:[%s3 + $0x18] sm:$0xff]
    %v280 = vsel %vm110, %v272, 0
    %282 = vmatpush.msra.mxu0 0.0
    %283 = vmatpush.msra.mxu0 0.0
    %284 = vmatpush.msra.mxu0 0.0
    %285 = vmatpush.msra.mxu0 0.0
    %286 = vmatpush.msra.mxu0 0.0
    %287 = vmatpush.msra.mxu0 0.0
    %288 = vmatpush.msra.mxu0 0.0
    %289 = vmatpush.msra.mxu0 0.0
    %290 = vmatpush.msra.mxu0 0.0
    %291 = vmatpush.msra.mxu0 0.0
    %292 = vmatpush.msra.mxu0 0.0
    %293 = vmatpush.msra.mxu0 0.0
    %294 = vmatpush.msra.mxu0 %v278
    %295 = vmatpush.msra.mxu0 %v277
    %296 = vmatpush.msra.mxu0 %v276
    %297 = vmatpush.msra.mxu0 %v275
    %298 = vmatmul.f32.gmra.mxu0 %v280
    %v299 = vpop.f32.mrf.mxu0
    %v300 = vadd.f32 0.0, %v299
    %301 = vdwg.mxu0
    %v302 = vadd.f32 %v274, %v300
    %v303 = vtanh.pop %v302
    %304 = vst.msk [vmem:[#allocation3 + $0x28] sm:$0xff] %vm110, %v303
    %v305 = vld [vmem:[#allocation2 + $0x30] sm:$0xff]
    %v306 = vld [vmem:[%s3] sm:$0xff]
    %v307 = vld [vmem:[%s3 + $0x8] sm:$0xff]
    %v308 = vld [vmem:[%s3 + $0x10] sm:$0xff]
    %v309 = vld [vmem:[%s3 + $0x18] sm:$0xff]
    %v311 = vsel %vm110, %v303, 0
    %313 = vmatpush.msra.mxu0 0.0
    %314 = vmatpush.msra.mxu0 0.0
    %315 = vmatpush.msra.mxu0 0.0
    %316 = vmatpush.msra.mxu0 0.0
    %317 = vmatpush.msra.mxu0 0.0
    %318 = vmatpush.msra.mxu0 0.0
    %319 = vmatpush.msra.mxu0 0.0
    %320 = vmatpush.msra.mxu0 0.0
    %321 = vmatpush.msra.mxu0 0.0
    %322 = vmatpush.msra.mxu0 0.0
    %323 = vmatpush.msra.mxu0 0.0
    %324 = vmatpush.msra.mxu0 0.0
    %325 = vmatpush.msra.mxu0 %v309
    %326 = vmatpush.msra.mxu0 %v308
    %327 = vmatpush.msra.mxu0 %v307
    %328 = vmatpush.msra.mxu0 %v306
    %329 = vmatmul.f32.gmra.mxu0 %v311
    %v330 = vpop.f32.mrf.mxu0
    %v331 = vadd.f32 0.0, %v330
    %332 = vdwg.mxu0
    %v333 = vadd.f32 %v305, %v331
    %v334 = vtanh.pop %v333
    %335 = vst.msk [vmem:[#allocation3 + $0x30] sm:$0xff] %vm110, %v334
    %v336 = vld [vmem:[#allocation2 + $0x38] sm:$0xff]
    %v337 = vld [vmem:[%s3] sm:$0xff]
    %v338 = vld [vmem:[%s3 + $0x8] sm:$0xff]
    %v339 = vld [vmem:[%s3 + $0x10] sm:$0xff]
    %v340 = vld [vmem:[%s3 + $0x18] sm:$0xff]
    %v342 = vsel %vm110, %v334, 0
    %344 = vmatpush.msra.mxu0 0.0
    %345 = vmatpush.msra.mxu0 0.0
    %346 = vmatpush.msra.mxu0 0.0
    %347 = vmatpush.msra.mxu0 0.0
    %348 = vmatpush.msra.mxu0 0.0
    %349 = vmatpush.msra.mxu0 0.0
    %350 = vmatpush.msra.mxu0 0.0
    %351 = vmatpush.msra.mxu0 0.0
    %352 = vmatpush.msra.mxu0 0.0
    %353 = vmatpush.msra.mxu0 0.0
    %354 = vmatpush.msra.mxu0 0.0
    %355 = vmatpush.msra.mxu0 0.0
    %356 = vmatpush.msra.mxu0 %v340
    %357 = vmatpush.msra.mxu0 %v339
    %358 = vmatpush.msra.mxu0 %v338
    %359 = vmatpush.msra.mxu0 %v337
    %360 = vmatmul.f32.gmra.mxu0 %v342
    %v361 = vpop.f32.mrf.mxu0
    %v362 = vadd.f32 0.0, %v361
    %363 = vdwg.mxu0
    %v364 = vadd.f32 %v336, %v362
    %v365 = vtanh.pop %v364
    %366 = vst.msk [vmem:[#allocation3 + $0x38] sm:$0xff] %vm110, %v365
    %v367 = vld [vmem:[#allocation3] sm:$0xff]
    %v368 = vld [vmem:[#allocation3 + $0x8] sm:$0xff]
    %v369 = vld [vmem:[#allocation3 + $0x10] sm:$0xff]
    %v370 = vld [vmem:[#allocation3 + $0x18] sm:$0xff]
    %v371 = vld [vmem:[#allocation3 + $0x20] sm:$0xff]
    %v372 = vld [vmem:[#allocation3 + $0x28] sm:$0xff]
    %v373 = vld [vmem:[#allocation3 + $0x30] sm:$0xff]
    %v374 = vld [vmem:[#allocation3 + $0x38] sm:$0xff]
    %v375 = vld [vmem:[%s5] sm:$0xff]
    %v376 = vld [vmem:[%s5 + $0x8] sm:$0xff]
    %v377 = vld [vmem:[%s5 + $0x10] sm:$0xff]
    %v378 = vld [vmem:[%s5 + $0x18] sm:$0xff]
    %v379 = vld [vmem:[%s1] sm:$0xff]
    %v380 = vld [vmem:[%s1 + $0x8] sm:$0xff]
    %v381 = vld [vmem:[%s1 + $0x10] sm:$0xff]
    %v382 = vld [vmem:[%s1 + $0x18] sm:$0xff]
    %v383 = vld [vmem:[%s1 + $0x20] sm:$0xff]
    %v384 = vld [vmem:[%s1 + $0x28] sm:$0xff]
    %v385 = vld [vmem:[%s1 + $0x30] sm:$0xff]
    %v386 = vld [vmem:[%s1 + $0x38] sm:$0xff]
    %v387 = vld [vmem:[%s6] sm:$0x1]
    %389 = vset.pattern.permute.xlu0 0
    %390 = vperm.xlu0 %389, %v379
    %v391 = vpop.permute.xlu0 %390
    %394 = vset.pattern.permute.xlu0 0
    %395 = vperm.xlu0 %394, %v380
    %v396 = vpop.permute.xlu0 %395
    %399 = vset.pattern.permute.xlu0 0
    %400 = vperm.xlu0 %399, %v381
    %v401 = vpop.permute.xlu0 %400
    %404 = vset.pattern.permute.xlu0 0
    %405 = vperm.xlu0 %404, %v382
    %v406 = vpop.permute.xlu0 %405
    %409 = vset.pattern.permute.xlu0 0
    %410 = vperm.xlu0 %409, %v383
    %v411 = vpop.permute.xlu0 %410
    %414 = vset.pattern.permute.xlu0 0
    %415 = vperm.xlu0 %414, %v384
    %v416 = vpop.permute.xlu0 %415
    %419 = vset.pattern.permute.xlu0 0
    %420 = vperm.xlu0 %419, %v385
    %v421 = vpop.permute.xlu0 %420
    %424 = vset.pattern.permute.xlu0 0
    %425 = vperm.xlu0 %424, %v386
    %v426 = vpop.permute.xlu0 %425
    %v429 = vperm.slane %v387, 0
    %v431 = vmul.f32 %v391, %v429
    %v432 = vmul.f32 %v396, %v429
    %v433 = vmul.f32 %v401, %v429
    %v434 = vmul.f32 %v406, %v429
    %v435 = vmul.f32 %v411, %v429
    %v436 = vmul.f32 %v416, %v429
    %v437 = vmul.f32 %v421, %v429
    %v438 = vmul.f32 %v426, %v429
    %v440 = vsel %vm110, %v367, 0
    %v443 = vsel %vm110, %v368, 0
    %v446 = vsel %vm110, %v369, 0
    %v449 = vsel %vm110, %v370, 0
    %v452 = vsel %vm110, %v371, 0
    %v455 = vsel %vm110, %v372, 0
    %v458 = vsel %vm110, %v373, 0
    %v461 = vsel %vm110, %v374, 0
    %463 = vmatpush.msra.mxu0 0.0
    %464 = vmatpush.msra.mxu0 0.0
    %465 = vmatpush.msra.mxu0 0.0
    %466 = vmatpush.msra.mxu0 0.0
    %467 = vmatpush.msra.mxu0 0.0
    %468 = vmatpush.msra.mxu0 0.0
    %469 = vmatpush.msra.mxu0 0.0
    %470 = vmatpush.msra.mxu0 0.0
    %471 = vmatpush.msra.mxu0 0.0
    %472 = vmatpush.msra.mxu0 0.0
    %473 = vmatpush.msra.mxu0 0.0
    %474 = vmatpush.msra.mxu0 0.0
    %475 = vmatpush.msra.mxu0 %v378
    %476 = vmatpush.msra.mxu0 %v377
    %477 = vmatpush.msra.mxu0 %v376
    %478 = vmatpush.msra.mxu0 %v375
    %479 = vmatmul.f32.gmra.mxu0 %v440
    %v480 = vpop.f32.mrf.mxu0
    %v481 = vadd.f32 %v431, %v480
    %482 = vmatmul.f32.gmra.mxu0 %v443
    %v483 = vpop.f32.mrf.mxu0
    %v484 = vadd.f32 %v432, %v483
    %485 = vmatmul.f32.gmra.mxu0 %v446
    %v486 = vpop.f32.mrf.mxu0
    %v487 = vadd.f32 %v433, %v486
    %488 = vmatmul.f32.gmra.mxu0 %v449
    %v489 = vpop.f32.mrf.mxu0
    %v490 = vadd.f32 %v434, %v489
    %491 = vmatmul.f32.gmra.mxu0 %v452
    %v492 = vpop.f32.mrf.mxu0
    %v493 = vadd.f32 %v435, %v492
    %494 = vmatmul.f32.gmra.mxu0 %v455
    %v495 = vpop.f32.mrf.mxu0
    %v496 = vadd.f32 %v436, %v495
    %497 = vmatmul.f32.gmra.mxu0 %v458
    %v498 = vpop.f32.mrf.mxu0
    %v499 = vadd.f32 %v437, %v498
    %500 = vmatmul.f32.gmra.mxu0 %v461
    %v501 = vpop.f32.mrf.mxu0
    %v502 = vadd.f32 %v438, %v501
    %503 = vdwg.mxu0
    %v504 = vld [vmem:[%s7] sm:$0x1]
    %v506 = vperm.slane %v504, 0
    %v508 = vadd.f32 %v481, %v506
    %v509 = vadd.f32 %v484, %v506
    %v510 = vadd.f32 %v487, %v506
    %v511 = vadd.f32 %v490, %v506
    %v512 = vadd.f32 %v493, %v506
    %v513 = vadd.f32 %v496, %v506
    %v514 = vadd.f32 %v499, %v506
    %v515 = vadd.f32 %v502, %v506
    %516 = vst [vmem:[#allocation4] sm:$0xff] %v508
    %517 = vst [vmem:[#allocation4 + $0x8] sm:$0xff] %v509
    %518 = vst [vmem:[#allocation4 + $0x10] sm:$0xff] %v510
    %519 = vst [vmem:[#allocation4 + $0x18] sm:$0xff] %v511
    %520 = vst [vmem:[#allocation4 + $0x20] sm:$0xff] %v512
    %521 = vst [vmem:[#allocation4 + $0x28] sm:$0xff] %v513
    %522 = vst [vmem:[#allocation4 + $0x30] sm:$0xff] %v514
    %523 = vst [vmem:[#allocation4 + $0x38] sm:$0xff] %v515
    // Predicated region
    $region34: #{tpu_custom_call.1} parent=1 // pred_check
      _
    $region35: #{tpu_custom_call.1} parent=1 // pred_check_branch
      %525 = sbr.rel (0) target = $region37
    $region36: #{tpu_custom_call.1} parent=1 // pred_region
      %527 = vsyncadd [#allocation5], 0
      %s528 = sshll.u32 [#allocation4], 4
      %s529 = int_to_ptr.vmem [resolvable:$true] %s528
      %s530 = sshll.u32 %s8, 4
      %s531 = int_to_ptr.hbm [resolvable:$true] %s530
      %536 = dma.vmem_to_hbm [thread:$0]  %s529, 1024, %s531, [#allocation5], 128, 128, 8
    $region37: #{tpu_custom_call.1} parent=1 // pred_fallthru
      _
    // Predicated region
    $region38: #{tpu_custom_call.1} parent=1 // pred_check
      _
    $region39: #{tpu_custom_call.1} parent=1 // pred_check_branch
      %538 = sbr.rel (0) target = $region41
    $region40: #{tpu_custom_call.1} parent=1 // pred_region
      %540 = dma.done [#allocation5], 1024
    $region41: #{tpu_custom_call.1} parent=1 // pred_fallthru
      _
    %541 = vsyncpa [#allocation5], 1

</llo_original>
